<compile_context>
chip_gen: v7x
topology: tpu7x:2x2x1
jax: 0.10.0
libtpu: 0.0.40
codegen_flags: <defaults>
</compile_context>

<pallas_src>
import jax
import jax.numpy as jnp
from jax.experimental import pallas as pl
from jax.experimental.pallas import tpu as pltpu


def _round_up(x: int, m: int) -> int:
    return (x + m - 1) // m * m


def _device_kind() -> str:
    try:
        return jax.devices()[0].device_kind.lower()
    except Exception:
        return ""


def _vmem_budget_bytes() -> int:
    """~75% of per-core VMEM capacity, generation-aware with safe fallbacks."""
    kind = _device_kind()
    cap = None
    try:
        cap = int(pltpu.get_tpu_info().vmem_capacity_bytes)
    except Exception:
        cap = None
    if not cap:
        if "v7" in kind or "7x" in kind:
            cap = 64 << 20            # v7x: 64 MiB per TensorCore
        elif "v5" in kind or "v6" in kind:
            cap = 128 << 20           # v5e / v6e: 128 MiB
        else:
            cap = 64 << 20            # unknown: be conservative
    # v7x VMEM is per-TensorCore (64 MiB); never budget beyond that there.
    if ("v7" in kind or "7x" in kind) and cap > (64 << 20):
        cap = 64 << 20
    return (cap * 3) // 4


# ----------------------------- kernels ---------------------------------------

def ffn_resident_kernel(x_ref, w1_ref, b1_ref, w2_ref, b2_ref, o_ref):
    # Weights are resident (constant block index): one body, two matmuls.
    h = jnp.dot(x_ref[...], w1_ref[...], preferred_element_type=jnp.float32)
    h = jnp.maximum(h + b1_ref[...].astype(jnp.float32), 0.0)
    y = jnp.dot(h.astype(x_ref.dtype), w2_ref[...],
                preferred_element_type=jnp.float32)
    o_ref[...] = (y + b2_ref[...].astype(jnp.float32)).astype(o_ref.dtype)


def ffn_stream_kernel(x_ref, w1_ref, b1_ref, w2_ref, b2_ref, o_ref, acc_ref):
    # x_ref:  (tm, d_model)      w1_ref: (d_model, tk)   b1_ref: (1, tk)
    # w2_ref: (tk, d_model)      b2_ref: (1, d_model)
    # o_ref:  (tm, d_model)      acc_ref: (tm, d_model) f32 scratch
    k = pl.program_id(1)

    @pl.when(k == 0)
    def _init():
        # Fold b2 into the accumulator init; finalize is then just a cast.
        acc_ref[...] = jnp.broadcast_to(b2_ref[...].astype(jnp.float32),
                                        acc_ref.shape)

    h = jnp.dot(x_ref[...], w1_ref[...], preferred_element_type=jnp.float32)
    h = jnp.maximum(h + b1_ref[...].astype(jnp.float32), 0.0)
    acc_ref[...] += jnp.dot(h.astype(x_ref.dtype), w2_ref[...],
                            preferred_element_type=jnp.float32)

    @pl.when(k == pl.num_programs(1) - 1)
    def _finalize():
        o_ref[...] = acc_ref[...].astype(o_ref.dtype)


# ----------------------------- wrapper ----------------------------------------

def position_wise_ff(x, w1, b1, w2, b2, *, tm=None, tk_ff=None,
                     force_streaming=False):
    """x: (B, S, d_model); w1: (d_model, d_ff); b1: (d_ff,);
       w2: (d_ff, d_model); b2: (d_model,)."""
    B, S, d_model = x.shape
    d_ff = w1.shape[1]
    M = B * S

    x_isz = jnp.dtype(x.dtype).itemsize
    w_isz = jnp.dtype(w1.dtype).itemsize

    kind = _device_kind()
    vmem_budget = _vmem_budget_bytes()

    # ---- generation-aware tile targets --------------------------------------
    if tm is None:
        if "v7" in kind or "7x" in kind:
            tm = 512            # compute-bound at ~311 FLOPs/byte, VMEM is tight
        elif "v6" in kind:
            tm = 1024           # needs ~655 FLOPs/byte to be compute-bound
        else:
            tm = 512            # v5e / unknown
    if tk_ff is None:
        tk_ff = 512 if ("v7" in kind or "7x" in kind) else 1024

    # Row tile: multiple of 128 (full MXU tiles, unmasked lane-dense stores).
    tm_eff = max(128, _round_up(min(tm, M), 128))

    # ---- weights-resident fast path decision ---------------------------------
    def resident_bytes(tm_):
        fixed = 2 * (2 * d_model * d_ff * w_isz + (d_ff + d_model) * w_isz)
        per_rows = 2 * 2 * tm_ * d_model * x_isz + tm_ * d_ff * (4 + x_isz)
        return fixed + per_rows

    use_resident = False
    if not force_streaming:
        tm_res = tm_eff
        while resident_bytes(tm_res) > vmem_budget and tm_res > 128:
            tm_res = max(128, _round_up(tm_res // 2, 128))
        if resident_bytes(tm_res) <= vmem_budget:
            use_resident = True
            tm_eff = tm_res

    x2 = x.reshape(M, d_model)

    if use_resident:
        M_pad = _round_up(M, tm_eff)
        if M_pad != M:
            x2 = jnp.pad(x2, ((0, M_pad - M), (0, 0)))
        b1p = b1.reshape(1, d_ff)
        b2p = b2.reshape(1, d_model)
        grid = (M_pad // tm_eff,)

        cost = pl.CostEstimate(
            flops=4 * M_pad * d_model * d_ff,
            transcendentals=0,
            bytes_accessed=(2 * M_pad * d_model * x_isz
                            + (2 * d_model * d_ff + d_ff + d_model) * w_isz),
        )

        out2 = pl.pallas_call(
            ffn_resident_kernel,
            out_shape=jax.ShapeDtypeStruct((M_pad, d_model), x.dtype),
            grid_spec=pltpu.PrefetchScalarGridSpec(
                num_scalar_prefetch=0,
                grid=grid,
                in_specs=[
                    pl.BlockSpec((tm_eff, d_model), lambda i: (i, 0)),  # x rows
                    pl.BlockSpec((d_model, d_ff), lambda i: (0, 0)),    # W1 (resident)
                    pl.BlockSpec((1, d_ff), lambda i: (0, 0)),          # b1 (resident)
                    pl.BlockSpec((d_ff, d_model), lambda i: (0, 0)),    # W2 (resident)
                    pl.BlockSpec((1, d_model), lambda i: (0, 0)),       # b2 (resident)
                ],
                out_specs=pl.BlockSpec((tm_eff, d_model), lambda i: (i, 0)),
            ),
            compiler_params=pltpu.CompilerParams(
                dimension_semantics=("parallel",),
                vmem_limit_bytes=int(vmem_budget),
            ),
            cost_estimate=cost,
        )(x2, w1, b1p, w2, b2p)

        return out2[:M].reshape(B, S, d_model)

    # ---- streaming path: d_ff tiled on an innermost reduction axis ----------
    tk_eff = min(tk_ff, d_ff)
    if tk_eff < d_ff:
        tk_eff = _round_up(tk_eff, 256)       # fill the 256-wide MXU (v6e/v7x)
    if tk_eff >= d_ff:
        tk_eff = d_ff                         # single k step: block == full dim

    def stream_bytes(tm_, tk_):
        return (2 * (tm_ * d_model * x_isz        # x tile (double-buffered)
                     + d_model * tk_ * w_isz      # W1 slice
                     + tk_ * w_isz                # b1 slice
                     + tk_ * d_model * w_isz      # W2 slice
                     + d_model * w_isz            # b2
                     + tm_ * d_model * x_isz)     # out tile
                + tm_ * d_model * 4               # f32 acc scratch
                + tm_ * tk_ * (4 + x_isz))        # h intermediate headroom

    while stream_bytes(tm_eff, tk_eff) > vmem_budget:
        if tk_eff > 256 and tk_eff < d_ff:
            tk_eff = max(256, _round_up(tk_eff // 2, 256))
        elif tk_eff >= d_ff and d_ff > 256:
            tk_eff = max(256, _round_up(d_ff // 2, 256))
        elif tm_eff > 128:
            tm_eff = max(128, _round_up(tm_eff // 2, 128))
        else:
            break
    if tk_eff >= d_ff:
        tk_eff = d_ff

    M_pad = _round_up(M, tm_eff)
    dff_pad = _round_up(d_ff, tk_eff)

    if M_pad != M:
        x2 = jnp.pad(x2, ((0, M_pad - M), (0, 0)))
    w1p = w1
    b1p = b1.reshape(1, d_ff)
    w2p = w2
    if dff_pad != d_ff:
        w1p = jnp.pad(w1, ((0, 0), (0, dff_pad - d_ff)))
        b1p = jnp.pad(b1p, ((0, 0), (0, dff_pad - d_ff)))
        w2p = jnp.pad(w2, ((0, dff_pad - d_ff), (0, 0)))
    b2p = b2.reshape(1, d_model)

    grid = (M_pad // tm_eff, dff_pad // tk_eff)
    n_row_tiles = grid[0]

    cost = pl.CostEstimate(
        flops=4 * M_pad * d_model * dff_pad,
        transcendentals=0,
        bytes_accessed=(2 * M_pad * d_model * x_isz
                        + n_row_tiles
                        * (2 * d_model * dff_pad + dff_pad + d_model) * w_isz),
    )

    out2 = pl.pallas_call(
        ffn_stream_kernel,
        out_shape=jax.ShapeDtypeStruct((M_pad, d_model), x.dtype),
        grid_spec=pltpu.PrefetchScalarGridSpec(
            num_scalar_prefetch=0,
            grid=grid,
            in_specs=[
                pl.BlockSpec((tm_eff, d_model), lambda i, k: (i, 0)),   # x rows
                pl.BlockSpec((d_model, tk_eff), lambda i, k: (0, k)),   # W1 slice
                pl.BlockSpec((1, tk_eff), lambda i, k: (0, k)),         # b1 slice
                pl.BlockSpec((tk_eff, d_model), lambda i, k: (k, 0)),   # W2 slice
                pl.BlockSpec((1, d_model), lambda i, k: (0, 0)),        # b2
            ],
            out_specs=pl.BlockSpec((tm_eff, d_model), lambda i, k: (i, 0)),
            scratch_shapes=[pltpu.VMEM((tm_eff, d_model), jnp.float32)],
        ),
        compiler_params=pltpu.CompilerParams(
            dimension_semantics=("parallel", "arbitrary"),
            vmem_limit_bytes=int(vmem_budget),
        ),
        cost_estimate=cost,
    )(x2, w1p, b1p, w2p, b2p)

    return out2[:M].reshape(B, S, d_model)


# ----------------------------- self-test ---------------------------------------

if __name__ == "__main__":
    key = jax.random.PRNGKey(0)
    kx, k1, kb1, k2, kb2, kx2 = jax.random.split(key, 6)

    # ---- test 1: f32, odd shapes (M padding; resident fast path) -------------
    B, S, d_model, d_ff = 2, 7, 128, 192
    x = jax.random.normal(kx, (B, S, d_model), dtype=jnp.float32)

    bound1 = 1.0 / jnp.sqrt(d_model)
    bound2 = 1.0 / jnp.sqrt(d_ff)
    w1 = jax.random.uniform(k1, (d_model, d_ff), jnp.float32, -bound1, bound1)
    b1 = jax.random.uniform(kb1, (d_ff,), jnp.float32, -bound1, bound1)
    w2 = jax.random.uniform(k2, (d_ff, d_model), jnp.float32, -bound2, bound2)
    b2 = jax.random.uniform(kb2, (d_model,), jnp.float32, -bound2, bound2)

    out = jax.block_until_ready(position_wise_ff(x, w1, b1, w2, b2))
    ref = jnp.maximum(x @ w1 + b1, 0.0) @ w2 + b2
    assert out.shape == (B, S, d_model)
    assert jnp.allclose(out, ref, atol=1e-3, rtol=1e-3), \
        float(jnp.max(jnp.abs(out - ref)))

    # ---- test 2: bf16 fast path (resident, native MXU dtype) -----------------
    B2, S2, dm2, dff2 = 2, 8, 128, 256
    xb = jax.random.normal(kx2, (B2, S2, dm2), dtype=jnp.float32)
    b1a = 1.0 / jnp.sqrt(dm2)
    b2a = 1.0 / jnp.sqrt(dff2)
    w1b = jax.random.uniform(k1, (dm2, dff2), jnp.float32, -b1a, b1a)
    b1b = jax.random.uniform(kb1, (dff2,), jnp.float32, -b1a, b1a)
    w2b = jax.random.uniform(k2, (dff2, dm2), jnp.float32, -b2a, b2a)
    b2b = jax.random.uniform(kb2, (dm2,), jnp.float32, -b2a, b2a)

    out_bf16 = jax.block_until_ready(position_wise_ff(
        xb.astype(jnp.bfloat16), w1b.astype(jnp.bfloat16),
        b1b.astype(jnp.bfloat16), w2b.astype(jnp.bfloat16),
        b2b.astype(jnp.bfloat16)))
    ref_bf16 = jnp.maximum(xb @ w1b + b1b, 0.0) @ w2b + b2b
    assert out_bf16.shape == (B2, S2, dm2)
    assert jnp.allclose(out_bf16.astype(jnp.float32), ref_bf16,
                        atol=5e-2, rtol=5e-2), \
        float(jnp.max(jnp.abs(out_bf16.astype(jnp.float32) - ref_bf16)))

    # ---- test 3: forced streaming path (k-reduction + d_ff padding) ----------
    B3, S3, dm3, dff3 = 2, 9, 128, 640
    x3 = jax.random.normal(kx, (B3, S3, dm3), dtype=jnp.float32)
    b1c = 1.0 / jnp.sqrt(dm3)
    b2c = 1.0 / jnp.sqrt(dff3)
    w1c = jax.random.uniform(k1, (dm3, dff3), jnp.float32, -b1c, b1c)
    b1v = jax.random.uniform(kb1, (dff3,), jnp.float32, -b1c, b1c)
    w2c = jax.random.uniform(k2, (dff3, dm3), jnp.float32, -b2c, b2c)
    b2v = jax.random.uniform(kb2, (dm3,), jnp.float32, -b2c, b2c)

    out3 = jax.block_until_ready(position_wise_ff(
        x3, w1c, b1v, w2c, b2v, tk_ff=256, force_streaming=True))
    ref3 = jnp.maximum(x3 @ w1c + b1v, 0.0) @ w2c + b2v
    assert out3.shape == (B3, S3, dm3)
    assert jnp.allclose(out3, ref3, atol=1e-3, rtol=1e-3), \
        float(jnp.max(jnp.abs(out3 - ref3)))

    print("KERNEL_OK")
</pallas_src>

<mosaic_0001>
module attributes {stable_mosaic.version = 11 : i64} {
  func.func @ffn_resident_kernel(%arg0: i32, %arg1: memref<128x128xf32, #tpu.memory_space<vmem>>, %arg2: memref<128x192xf32, #tpu.memory_space<vmem>>, %arg3: memref<1x192xf32, #tpu.memory_space<vmem>>, %arg4: memref<192x128xf32, #tpu.memory_space<vmem>>, %arg5: memref<1x128xf32, #tpu.memory_space<vmem>>, %arg6: memref<128x128xf32, #tpu.memory_space<vmem>>) attributes {dimension_semantics = [#tpu.dimension_semantics<parallel>], iteration_bounds = array<i64: 1>, scalar_prefetch = 0 : i64, scratch_operands = 0 : i64, tpu.core_type = #tpu.core_type<tc>, window_params = [{transform_indices = @transform_0, window_bounds = array<i64: 128, 128>}, {pipeline_mode = #tpu.pipeline_mode<synchronous>, transform_indices = @transform_1, window_bounds = array<i64: 128, 192>}, {pipeline_mode = #tpu.pipeline_mode<synchronous>, transform_indices = @transform_2, window_bounds = array<i64: 1, 192>}, {pipeline_mode = #tpu.pipeline_mode<synchronous>, transform_indices = @transform_3, window_bounds = array<i64: 192, 128>}, {pipeline_mode = #tpu.pipeline_mode<synchronous>, transform_indices = @transform_4, window_bounds = array<i64: 1, 128>}, {transform_indices = @transform_5, window_bounds = array<i64: 128, 128>}]} {
    %c0 = arith.constant 0 : index
    %c0_0 = arith.constant 0 : index
    %0 = vector.load %arg1[%c0, %c0_0] : memref<128x128xf32, #tpu.memory_space<vmem>>, vector<128x128xf32>
    %c0_1 = arith.constant 0 : index
    %c0_2 = arith.constant 0 : index
    %1 = vector.load %arg2[%c0_1, %c0_2] : memref<128x192xf32, #tpu.memory_space<vmem>>, vector<128x192xf32>
    %cst = arith.constant dense<0.000000e+00> : vector<128x192xf32>
    %2 = tpu.matmul %0, %1, %cst {dimension_numbers = #tpu.dot_dimension_numbers<[1], [0], [0], [1], [0, 0, 1, 1], [], []>} : vector<128x128xf32>, vector<128x192xf32>, vector<128x192xf32> -> vector<128x192xf32>
    %c0_3 = arith.constant 0 : index
    %c0_4 = arith.constant 0 : index
    %3 = vector.load %arg3[%c0_3, %c0_4] : memref<1x192xf32, #tpu.memory_space<vmem>>, vector<1x192xf32>
    %4 = vector.broadcast %3 : vector<1x192xf32> to vector<128x192xf32>
    %5 = arith.addf %2, %4 : vector<128x192xf32>
    %cst_5 = arith.constant 0.000000e+00 : f32
    %6 = vector.broadcast %cst_5 : f32 to vector<128x192xf32>
    %7 = arith.maximumf %5, %6 : vector<128x192xf32>
    %c0_6 = arith.constant 0 : index
    %c0_7 = arith.constant 0 : index
    %8 = vector.load %arg4[%c0_6, %c0_7] : memref<192x128xf32, #tpu.memory_space<vmem>>, vector<192x128xf32>
    %cst_8 = arith.constant dense<0.000000e+00> : vector<128x128xf32>
    %9 = tpu.matmul %7, %8, %cst_8 {dimension_numbers = #tpu.dot_dimension_numbers<[1], [0], [0], [1], [0, 0, 1, 1], [], []>} : vector<128x192xf32>, vector<192x128xf32>, vector<128x128xf32> -> vector<128x128xf32>
    %c0_9 = arith.constant 0 : index
    %c0_10 = arith.constant 0 : index
    %10 = vector.load %arg5[%c0_9, %c0_10] : memref<1x128xf32, #tpu.memory_space<vmem>>, vector<1x128xf32>
    %11 = vector.broadcast %10 : vector<1x128xf32> to vector<128x128xf32>
    %12 = arith.addf %9, %11 : vector<128x128xf32>
    %c0_11 = arith.constant 0 : index
    %c0_12 = arith.constant 0 : index
    %13 = vector.load %arg6[%c0_11, %c0_12] : memref<128x128xf32, #tpu.memory_space<vmem>>, vector<128x128xf32>
    tpu.vector_store %arg6[%c0_11, %c0_12], %12 {strides = array<i32>} : memref<128x128xf32, #tpu.memory_space<vmem>>, vector<128x128xf32>,
    return
  }
  func.func @transform_0(%arg0: i32) -> (i32, i32) {
    %c0_i32 = arith.constant 0 : i32
    %c0_i32_0 = arith.constant 0 : i32
    return %arg0, %c0_i32 : i32, i32
  }
  func.func @transform_1(%arg0: i32) -> (i32, i32) {
    %c0_i32 = arith.constant 0 : i32
    %c0_i32_0 = arith.constant 0 : i32
    %c0_i32_1 = arith.constant 0 : i32
    return %c0_i32, %c0_i32_0 : i32, i32
  }
  func.func @transform_2(%arg0: i32) -> (i32, i32) {
    %c0_i32 = arith.constant 0 : i32
    %c0_i32_0 = arith.constant 0 : i32
    %c0_i32_1 = arith.constant 0 : i32
    return %c0_i32, %c0_i32_0 : i32, i32
  }
  func.func @transform_3(%arg0: i32) -> (i32, i32) {
    %c0_i32 = arith.constant 0 : i32
    %c0_i32_0 = arith.constant 0 : i32
    %c0_i32_1 = arith.constant 0 : i32
    return %c0_i32, %c0_i32_0 : i32, i32
  }
  func.func @transform_4(%arg0: i32) -> (i32, i32) {
    %c0_i32 = arith.constant 0 : i32
    %c0_i32_0 = arith.constant 0 : i32
    %c0_i32_1 = arith.constant 0 : i32
    return %c0_i32, %c0_i32_0 : i32, i32
  }
  func.func @transform_5(%arg0: i32) -> (i32, i32) {
    %c0_i32 = arith.constant 0 : i32
    %c0_i32_0 = arith.constant 0 : i32
    return %arg0, %c0_i32 : i32, i32
  }
}

</mosaic_0001>

<llo_original>
// kernel: tpu_custom_call.1
$region0: #{tpu_custom_call.1}
  #allocation0 [shape = 'u32[]', space=smem, size = 0x4, offset = 0x4, fixed_abs, tag = 'smem constant byte address 0x4 - core index']
  #allocation1 [shape = 'u32[144,128]{1,0:T(1,128)}', space=vmem, size = 0x12000, scoped, tag = 'internal scratch']
  %s0 = inlined_call_operand.vmem [shape: f32[128,128], index: 0, kind: input, shape index: {}]
  %s1 = inlined_call_operand.vmem [shape: f32[128,192], index: 1, kind: input, shape index: {}]
  %s2 = inlined_call_operand.vmem [shape: f32[1,192], index: 2, kind: input, shape index: {}]
  %s3 = inlined_call_operand.vmem [shape: f32[192,128], index: 3, kind: input, shape index: {}]
  %s4 = inlined_call_operand.vmem [shape: f32[1,128], index: 4, kind: input, shape index: {}]
  %s5 = inlined_call_operand.hbm [shape: f32[128,128], index: 5, kind: output, shape index: {}]
  %s6 = sld [smem:[#allocation0]]
  $region30: #{tpu_custom_call.1} parent=0
    _
  %s8 = ssub.s32 1, %s6
  %s9 = scalar_select 0, %s8, %s6
  $region1: #{tpu_custom_call.1} parent=0
    #allocation2 [shape = 'u8[65536]{0}', space=vmem, size = 0x10000, scoped, tag = 'output window, operand 0, single buffered']
    #allocation3 [shape = 's32[1]{0}', space=sflag, size = 0x4, scoped, tag = 'scoped memory for tpu_custom_call.1']
    %10 = vsyncpa [#allocation3], 0
    // Predicated region
    $region2: #{tpu_custom_call.1} parent=1 // pred_check
      _
    $region3: #{tpu_custom_call.1} parent=1 // pred_check_branch
      %12 = sbr.rel (0) target = $region5
    $region4: #{tpu_custom_call.1} parent=1 // pred_region
      _
    $region5: #{tpu_custom_call.1} parent=1 // pred_fallthru
      _
    // Predicated region
    $region6: #{tpu_custom_call.1} parent=1 // pred_check
      _
    $region7: #{tpu_custom_call.1} parent=1 // pred_check_branch
      %14 = sbr.rel (0) target = $region9
    $region8: #{tpu_custom_call.1} parent=1 // pred_region
      _
    $region9: #{tpu_custom_call.1} parent=1 // pred_fallthru
      _
    // Predicated region
    $region10: #{tpu_custom_call.1} parent=1 // pred_check
      _
    $region11: #{tpu_custom_call.1} parent=1 // pred_check_branch
      %16 = sbr.rel (0) target = $region13
    $region12: #{tpu_custom_call.1} parent=1 // pred_region
      _
    $region13: #{tpu_custom_call.1} parent=1 // pred_fallthru
      _
    // Predicated region
    $region14: #{tpu_custom_call.1} parent=1 // pred_check
      _
    $region15: #{tpu_custom_call.1} parent=1 // pred_check_branch
      %18 = sbr.rel (0) target = $region17
    $region16: #{tpu_custom_call.1} parent=1 // pred_region
      _
    $region17: #{tpu_custom_call.1} parent=1 // pred_fallthru
      _
    // Predicated region
    $region18: #{tpu_custom_call.1} parent=1 // pred_check
      _
    $region19: #{tpu_custom_call.1} parent=1 // pred_check_branch
      %20 = sbr.rel (0) target = $region21
    $region20: #{tpu_custom_call.1} parent=1 // pred_region
      _
    $region21: #{tpu_custom_call.1} parent=1 // pred_fallthru
      _
    %v21 = vld [vmem:[%s0] sm:$0xff]
    %v22 = vld [vmem:[%s0 + $0x8] sm:$0xff]
    %v23 = vld [vmem:[%s0 + $0x10] sm:$0xff]
    %v24 = vld [vmem:[%s0 + $0x18] sm:$0xff]
    %v25 = vld [vmem:[%s0 + $0x20] sm:$0xff]
    %v26 = vld [vmem:[%s0 + $0x28] sm:$0xff]
    %v27 = vld [vmem:[%s0 + $0x30] sm:$0xff]
    %v28 = vld [vmem:[%s0 + $0x38] sm:$0xff]
    %v29 = vld [vmem:[%s0 + $0x40] sm:$0xff]
    %v30 = vld [vmem:[%s0 + $0x48] sm:$0xff]
    %v31 = vld [vmem:[%s0 + $0x50] sm:$0xff]
    %v32 = vld [vmem:[%s0 + $0x58] sm:$0xff]
    %v33 = vld [vmem:[%s0 + $0x60] sm:$0xff]
    %v34 = vld [vmem:[%s0 + $0x68] sm:$0xff]
    %v35 = vld [vmem:[%s0 + $0x70] sm:$0xff]
    %v36 = vld [vmem:[%s0 + $0x78] sm:$0xff]
    %v37 = vld [vmem:[%s1] sm:$0xff]
    %v38 = vld [vmem:[%s1 + $0x8] sm:$0xff]
    %v39 = vld [vmem:[%s1 + $0x10] sm:$0xff]
    %v40 = vld [vmem:[%s1 + $0x18] sm:$0xff]
    %v41 = vld [vmem:[%s1 + $0x20] sm:$0xff]
    %v42 = vld [vmem:[%s1 + $0x28] sm:$0xff]
    %v43 = vld [vmem:[%s1 + $0x30] sm:$0xff]
    %v44 = vld [vmem:[%s1 + $0x38] sm:$0xff]
    %v45 = vld [vmem:[%s1 + $0x40] sm:$0xff]
    %v46 = vld [vmem:[%s1 + $0x48] sm:$0xff]
    %v47 = vld [vmem:[%s1 + $0x50] sm:$0xff]
    %v48 = vld [vmem:[%s1 + $0x58] sm:$0xff]
    %v49 = vld [vmem:[%s1 + $0x60] sm:$0xff]
    %v50 = vld [vmem:[%s1 + $0x68] sm:$0xff]
    %v51 = vld [vmem:[%s1 + $0x70] sm:$0xff]
    %v52 = vld [vmem:[%s1 + $0x78] sm:$0xff]
    %v53 = vld [vmem:[%s1 + $0x80] sm:$0xff]
    %v54 = vld [vmem:[%s1 + $0x88] sm:$0xff]
    %v55 = vld [vmem:[%s1 + $0x90] sm:$0xff]
    %v56 = vld [vmem:[%s1 + $0x98] sm:$0xff]
    %v57 = vld [vmem:[%s1 + $0xa0] sm:$0xff]
    %v58 = vld [vmem:[%s1 + $0xa8] sm:$0xff]
    %v59 = vld [vmem:[%s1 + $0xb0] sm:$0xff]
    %v60 = vld [vmem:[%s1 + $0xb8] sm:$0xff]
    %v61 = vld [vmem:[%s1 + $0xc0] sm:$0xff]
    %v62 = vld [vmem:[%s1 + $0xc8] sm:$0xff]
    %v63 = vld [vmem:[%s1 + $0xd0] sm:$0xff]
    %v64 = vld [vmem:[%s1 + $0xd8] sm:$0xff]
    %v65 = vld [vmem:[%s1 + $0xe0] sm:$0xff]
    %v66 = vld [vmem:[%s1 + $0xe8] sm:$0xff]
    %v67 = vld [vmem:[%s1 + $0xf0] sm:$0xff]
    %v68 = vld [vmem:[%s1 + $0xf8] sm:$0xff]
    %v69 = vld [vmem:[%s2] sm:$0x3]
    %v71 = vlaneseq
    %v72 = vshrl.u32 %v71, 7
    %v73 = vsub.s32 0, %v72
    %v74 = vrot.slane %v69, %v73
    %v75 = vlaneseq
    %v76 = vshrl.u32 %v75, 7
    %v77 = vsub.s32 1, %v76
    %v78 = vrot.slane %v69, %v77
    %81 = vmatprep.subr.mxu0 %v38
    %82 = vmatpush1.msra.mxu0 %v37
    %83 = vmatprep.subr.mxu0 %v40
    %84 = vmatpush1.msra.mxu0 %v39
    %85 = vmatprep.subr.mxu0 %v42
    %86 = vmatpush1.msra.mxu0 %v41
    %87 = vmatprep.subr.mxu0 %v44
    %88 = vmatpush1.msra.mxu0 %v43
    %89 = vmatprep.subr.mxu0 %v46
    %90 = vmatpush1.msra.mxu0 %v45
    %91 = vmatprep.subr.mxu0 %v48
    %92 = vmatpush1.msra.mxu0 %v47
    %93 = vmatprep.subr.mxu0 %v50
    %94 = vmatpush1.msra.mxu0 %v49
    %95 = vmatprep.subr.mxu0 %v52
    %96 = vmatpush1.msra.mxu0 %v51
    %97 = vmatprep.subr.mxu0 %v54
    %98 = vmatpush1.msra.mxu0 %v53
    %99 = vmatprep.subr.mxu0 %v56
    %100 = vmatpush1.msra.mxu0 %v55
    %101 = vmatprep.subr.mxu0 %v58
    %102 = vmatpush1.msra.mxu0 %v57
    %103 = vmatprep.subr.mxu0 %v60
    %104 = vmatpush1.msra.mxu0 %v59
    %105 = vmatprep.subr.mxu0 %v62
    %106 = vmatpush1.msra.mxu0 %v61
    %107 = vmatprep.subr.mxu0 %v64
    %108 = vmatpush1.msra.mxu0 %v63
    %109 = vmatprep.subr.mxu0 %v66
    %110 = vmatpush1.msra.mxu0 %v65
    %111 = vmatprep.subr.mxu0 %v68
    %112 = vmatpush1.msra.mxu0 %v67
    %113 = vmatprep.subr.mxu0 0.0
    %114 = vmatpush1.msra.mxu0 0.0
    %115 = vmatprep.subr.mxu0 0.0
    %116 = vmatpush1.msra.mxu0 0.0
    %117 = vmatprep.subr.mxu0 0.0
    %118 = vmatpush1.msra.mxu0 0.0
    %119 = vmatprep.subr.mxu0 0.0
    %120 = vmatpush1.msra.mxu0 0.0
    %121 = vmatprep.subr.mxu0 0.0
    %122 = vmatpush1.msra.mxu0 0.0
    %123 = vmatprep.subr.mxu0 0.0
    %124 = vmatpush1.msra.mxu0 0.0
    %125 = vmatprep.subr.mxu0 0.0
    %126 = vmatpush1.msra.mxu0 0.0
    %127 = vmatprep.subr.mxu0 0.0
    %128 = vmatpush1.msra.mxu0 0.0
    %129 = vmatprep.subr.mxu0 0.0
    %130 = vmatpush1.msra.mxu0 0.0
    %131 = vmatprep.subr.mxu0 0.0
    %132 = vmatpush1.msra.mxu0 0.0
    %133 = vmatprep.subr.mxu0 0.0
    %134 = vmatpush1.msra.mxu0 0.0
    %135 = vmatprep.subr.mxu0 0.0
    %136 = vmatpush1.msra.mxu0 0.0
    %137 = vmatprep.subr.mxu0 0.0
    %138 = vmatpush1.msra.mxu0 0.0
    %139 = vmatprep.subr.mxu0 0.0
    %140 = vmatpush1.msra.mxu0 0.0
    %141 = vmatprep.subr.mxu0 0.0
    %142 = vmatpush1.msra.mxu0 0.0
    %143 = vmatprep.subr.mxu0 0.0
    %144 = vmatpush1.msra.mxu0 0.0
    %145 = vmatprep.mubr.f32.mxu0 0.0
    %146 = vmatmul.mubr.f32.gmra.mrb[0].mxu0 %v21
    %v147 = vpop.f32.mrb[0].mxu0
    %v148 = vadd.f32 %v74, %v147
    %v149 = vpop.f32.mrb[0].mxu0
    %v150 = vadd.f32 %v78, %v149
    %151 = vmatprep.mubr.f32.mxu0 0.0
    %152 = vmatmul.mubr.f32.gmra.mrb[0].mxu0 %v22
    %v153 = vpop.f32.mrb[0].mxu0
    %v154 = vadd.f32 %v74, %v153
    %v155 = vpop.f32.mrb[0].mxu0
    %v156 = vadd.f32 %v78, %v155
    %157 = vmatprep.mubr.f32.mxu0 0.0
    %158 = vmatmul.mubr.f32.gmra.mrb[0].mxu0 %v23
    %v159 = vpop.f32.mrb[0].mxu0
    %v160 = vadd.f32 %v74, %v159
    %v161 = vpop.f32.mrb[0].mxu0
    %v162 = vadd.f32 %v78, %v161
    %163 = vmatprep.mubr.f32.mxu0 0.0
    %164 = vmatmul.mubr.f32.gmra.mrb[0].mxu0 %v24
    %v165 = vpop.f32.mrb[0].mxu0
    %v166 = vadd.f32 %v74, %v165
    %v167 = vpop.f32.mrb[0].mxu0
    %v168 = vadd.f32 %v78, %v167
    %169 = vmatprep.mubr.f32.mxu0 0.0
    %170 = vmatmul.mubr.f32.gmra.mrb[0].mxu0 %v25
    %v171 = vpop.f32.mrb[0].mxu0
    %v172 = vadd.f32 %v74, %v171
    %v173 = vpop.f32.mrb[0].mxu0
    %v174 = vadd.f32 %v78, %v173
    %175 = vmatprep.mubr.f32.mxu0 0.0
    %176 = vmatmul.mubr.f32.gmra.mrb[0].mxu0 %v26
    %v177 = vpop.f32.mrb[0].mxu0
    %v178 = vadd.f32 %v74, %v177
    %v179 = vpop.f32.mrb[0].mxu0
    %v180 = vadd.f32 %v78, %v179
    %181 = vmatprep.mubr.f32.mxu0 0.0
    %182 = vmatmul.mubr.f32.gmra.mrb[0].mxu0 %v27
    %v183 = vpop.f32.mrb[0].mxu0
    %v184 = vadd.f32 %v74, %v183
    %v185 = vpop.f32.mrb[0].mxu0
    %v186 = vadd.f32 %v78, %v185
    %187 = vmatprep.mubr.f32.mxu0 0.0
    %188 = vmatmul.mubr.f32.gmra.mrb[0].mxu0 %v28
    %v189 = vpop.f32.mrb[0].mxu0
    %v190 = vadd.f32 %v74, %v189
    %v191 = vpop.f32.mrb[0].mxu0
    %v192 = vadd.f32 %v78, %v191
    %193 = vmatprep.mubr.f32.mxu0 0.0
    %194 = vmatmul.mubr.f32.gmra.mrb[0].mxu0 %v29
    %v195 = vpop.f32.mrb[0].mxu0
    %v196 = vadd.f32 %v74, %v195
    %v197 = vpop.f32.mrb[0].mxu0
    %v198 = vadd.f32 %v78, %v197
    %199 = vmatprep.mubr.f32.mxu0 0.0
    %200 = vmatmul.mubr.f32.gmra.mrb[0].mxu0 %v30
    %v201 = vpop.f32.mrb[0].mxu0
    %v202 = vadd.f32 %v74, %v201
    %v203 = vpop.f32.mrb[0].mxu0
    %v204 = vadd.f32 %v78, %v203
    %205 = vmatprep.mubr.f32.mxu0 0.0
    %206 = vmatmul.mubr.f32.gmra.mrb[0].mxu0 %v31
    %v207 = vpop.f32.mrb[0].mxu0
    %v208 = vadd.f32 %v74, %v207
    %v209 = vpop.f32.mrb[0].mxu0
    %v210 = vadd.f32 %v78, %v209
    %211 = vmatprep.mubr.f32.mxu0 0.0
    %212 = vmatmul.mubr.f32.gmra.mrb[0].mxu0 %v32
    %v213 = vpop.f32.mrb[0].mxu0
    %v214 = vadd.f32 %v74, %v213
    %v215 = vpop.f32.mrb[0].mxu0
    %v216 = vadd.f32 %v78, %v215
    %217 = vmatprep.mubr.f32.mxu0 0.0
    %218 = vmatmul.mubr.f32.gmra.mrb[0].mxu0 %v33
    %v219 = vpop.f32.mrb[0].mxu0
    %v220 = vadd.f32 %v74, %v219
    %v221 = vpop.f32.mrb[0].mxu0
    %v222 = vadd.f32 %v78, %v221
    %223 = vmatprep.mubr.f32.mxu0 0.0
    %224 = vmatmul.mubr.f32.gmra.mrb[0].mxu0 %v34
    %v225 = vpop.f32.mrb[0].mxu0
    %v226 = vadd.f32 %v74, %v225
    %v227 = vpop.f32.mrb[0].mxu0
    %v228 = vadd.f32 %v78, %v227
    %229 = vmatprep.mubr.f32.mxu0 0.0
    %230 = vmatmul.mubr.f32.gmra.mrb[0].mxu0 %v35
    %v231 = vpop.f32.mrb[0].mxu0
    %v232 = vadd.f32 %v74, %v231
    %v233 = vpop.f32.mrb[0].mxu0
    %v234 = vadd.f32 %v78, %v233
    %235 = vmatprep.mubr.f32.mxu0 0.0
    %236 = vmatmul.mubr.f32.gmra.mrb[0].mxu0 %v36
    %v237 = vpop.f32.mrb[0].mxu0
    %v238 = vadd.f32 %v74, %v237
    %v239 = vpop.f32.mrb[0].mxu0
    %v240 = vadd.f32 %v78, %v239
    %241 = vdwg.mxu0
    %v242 = vmax.f32 %v148, 0.0
    %v243 = vmax.f32 %v150, 0.0
    %v244 = vmax.f32 %v154, 0.0
    %v245 = vmax.f32 %v156, 0.0
    %v246 = vmax.f32 %v160, 0.0
    %v247 = vmax.f32 %v162, 0.0
    %v248 = vmax.f32 %v166, 0.0
    %v249 = vmax.f32 %v168, 0.0
    %v250 = vmax.f32 %v172, 0.0
    %v251 = vmax.f32 %v174, 0.0
    %v252 = vmax.f32 %v178, 0.0
    %v253 = vmax.f32 %v180, 0.0
    %v254 = vmax.f32 %v184, 0.0
    %v255 = vmax.f32 %v186, 0.0
    %v256 = vmax.f32 %v190, 0.0
    %v257 = vmax.f32 %v192, 0.0
    %v258 = vmax.f32 %v196, 0.0
    %v259 = vmax.f32 %v198, 0.0
    %v260 = vmax.f32 %v202, 0.0
    %v261 = vmax.f32 %v204, 0.0
    %v262 = vmax.f32 %v208, 0.0
    %v263 = vmax.f32 %v210, 0.0
    %v264 = vmax.f32 %v214, 0.0
    %v265 = vmax.f32 %v216, 0.0
    %v266 = vmax.f32 %v220, 0.0
    %v267 = vmax.f32 %v222, 0.0
    %v268 = vmax.f32 %v226, 0.0
    %v269 = vmax.f32 %v228, 0.0
    %v270 = vmax.f32 %v232, 0.0
    %v271 = vmax.f32 %v234, 0.0
    %v272 = vmax.f32 %v238, 0.0
    %v273 = vmax.f32 %v240, 0.0
    %v274 = vld [vmem:[%s3] sm:$0xff]
    %v275 = vld [vmem:[%s3 + $0x8] sm:$0xff]
    %v276 = vld [vmem:[%s3 + $0x10] sm:$0xff]
    %v277 = vld [vmem:[%s3 + $0x18] sm:$0xff]
    %v278 = vld [vmem:[%s3 + $0x20] sm:$0xff]
    %v279 = vld [vmem:[%s3 + $0x28] sm:$0xff]
    %v280 = vld [vmem:[%s3 + $0x30] sm:$0xff]
    %v281 = vld [vmem:[%s3 + $0x38] sm:$0xff]
    %v282 = vld [vmem:[%s3 + $0x40] sm:$0xff]
    %v283 = vld [vmem:[%s3 + $0x48] sm:$0xff]
    %v284 = vld [vmem:[%s3 + $0x50] sm:$0xff]
    %v285 = vld [vmem:[%s3 + $0x58] sm:$0xff]
    %v286 = vld [vmem:[%s3 + $0x60] sm:$0xff]
    %v287 = vld [vmem:[%s3 + $0x68] sm:$0xff]
    %v288 = vld [vmem:[%s3 + $0x70] sm:$0xff]
    %v289 = vld [vmem:[%s3 + $0x78] sm:$0xff]
    %v290 = vld [vmem:[%s3 + $0x80] sm:$0xff]
    %v291 = vld [vmem:[%s3 + $0x88] sm:$0xff]
    %v292 = vld [vmem:[%s3 + $0x90] sm:$0xff]
    %v293 = vld [vmem:[%s3 + $0x98] sm:$0xff]
    %v294 = vld [vmem:[%s3 + $0xa0] sm:$0xff]
    %v295 = vld [vmem:[%s3 + $0xa8] sm:$0xff]
    %v296 = vld [vmem:[%s3 + $0xb0] sm:$0xff]
    %v297 = vld [vmem:[%s3 + $0xb8] sm:$0xff]
    %v298 = vld [vmem:[%s4] sm:$0x1]
    %v300 = vlaneseq
    %v301 = vshrl.u32 %v300, 7
    %v302 = vsub.s32 0, %v301
    %v303 = vrot.slane %v298, %v302
    %vm305 = vcmask 523264
    %v307 = vsel %vm305, %v243, 0
    %v310 = vsel %vm305, %v245, 0
    %v313 = vsel %vm305, %v247, 0
    %v316 = vsel %vm305, %v249, 0
    %v319 = vsel %vm305, %v251, 0
    %v322 = vsel %vm305, %v253, 0
    %v325 = vsel %vm305, %v255, 0
    %v328 = vsel %vm305, %v257, 0
    %v331 = vsel %vm305, %v259, 0
    %v334 = vsel %vm305, %v261, 0
    %v337 = vsel %vm305, %v263, 0
    %v340 = vsel %vm305, %v265, 0
    %v343 = vsel %vm305, %v267, 0
    %v346 = vsel %vm305, %v269, 0
    %v349 = vsel %vm305, %v271, 0
    %v352 = vsel %vm305, %v273, 0
    %354 = vmatprep.subr.mxu0 0.0
    %355 = vmatpush1.msra.mxu0 %v274
    %356 = vmatprep.subr.mxu0 0.0
    %357 = vmatpush1.msra.mxu0 %v275
    %358 = vmatprep.subr.mxu0 0.0
    %359 = vmatpush1.msra.mxu0 %v276
    %360 = vmatprep.subr.mxu0 0.0
    %361 = vmatpush1.msra.mxu0 %v277
    %362 = vmatprep.subr.mxu0 0.0
    %363 = vmatpush1.msra.mxu0 %v278
    %364 = vmatprep.subr.mxu0 0.0
    %365 = vmatpush1.msra.mxu0 %v279
    %366 = vmatprep.subr.mxu0 0.0
    %367 = vmatpush1.msra.mxu0 %v280
    %368 = vmatprep.subr.mxu0 0.0
    %369 = vmatpush1.msra.mxu0 %v281
    %370 = vmatprep.subr.mxu0 0.0
    %371 = vmatpush1.msra.mxu0 %v282
    %372 = vmatprep.subr.mxu0 0.0
    %373 = vmatpush1.msra.mxu0 %v283
    %374 = vmatprep.subr.mxu0 0.0
    %375 = vmatpush1.msra.mxu0 %v284
    %376 = vmatprep.subr.mxu0 0.0
    %377 = vmatpush1.msra.mxu0 %v285
    %378 = vmatprep.subr.mxu0 0.0
    %379 = vmatpush1.msra.mxu0 %v286
    %380 = vmatprep.subr.mxu0 0.0
    %381 = vmatpush1.msra.mxu0 %v287
    %382 = vmatprep.subr.mxu0 0.0
    %383 = vmatpush1.msra.mxu0 %v288
    %384 = vmatprep.subr.mxu0 0.0
    %385 = vmatpush1.msra.mxu0 %v289
    %386 = vmatprep.subr.mxu0 0.0
    %387 = vmatpush1.msra.mxu0 %v290
    %388 = vmatprep.subr.mxu0 0.0
    %389 = vmatpush1.msra.mxu0 %v291
    %390 = vmatprep.subr.mxu0 0.0
    %391 = vmatpush1.msra.mxu0 %v292
    %392 = vmatprep.subr.mxu0 0.0
    %393 = vmatpush1.msra.mxu0 %v293
    %394 = vmatprep.subr.mxu0 0.0
    %395 = vmatpush1.msra.mxu0 %v294
    %396 = vmatprep.subr.mxu0 0.0
    %397 = vmatpush1.msra.mxu0 %v295
    %398 = vmatprep.subr.mxu0 0.0
    %399 = vmatpush1.msra.mxu0 %v296
    %400 = vmatprep.subr.mxu0 0.0
    %401 = vmatpush1.msra.mxu0 %v297
    %402 = vmatprep.subr.mxu0 0.0
    %403 = vmatpush1.msra.mxu0 0.0
    %404 = vmatprep.subr.mxu0 0.0
    %405 = vmatpush1.msra.mxu0 0.0
    %406 = vmatprep.subr.mxu0 0.0
    %407 = vmatpush1.msra.mxu0 0.0
    %408 = vmatprep.subr.mxu0 0.0
    %409 = vmatpush1.msra.mxu0 0.0
    %410 = vmatprep.subr.mxu0 0.0
    %411 = vmatpush1.msra.mxu0 0.0
    %412 = vmatprep.subr.mxu0 0.0
    %413 = vmatpush1.msra.mxu0 0.0
    %414 = vmatprep.subr.mxu0 0.0
    %415 = vmatpush1.msra.mxu0 0.0
    %416 = vmatprep.subr.mxu0 0.0
    %417 = vmatpush1.msra.mxu0 0.0
    %418 = vmatprep.mubr.f32.mxu0 %v307
    %419 = vmatmul.mubr.f32.gmra.mrb[0].mxu0 %v242
    %v420 = vpop.f32.mrb[0].mxu0
    %v421 = vadd.f32 %v303, %v420
    %v422 = vpop.f32.mrb[0].mxu0
    %423 = vmatprep.mubr.f32.mxu0 %v310
    %424 = vmatmul.mubr.f32.gmra.mrb[0].mxu0 %v244
    %v425 = vpop.f32.mrb[0].mxu0
    %v426 = vadd.f32 %v303, %v425
    %v427 = vpop.f32.mrb[0].mxu0
    %428 = vmatprep.mubr.f32.mxu0 %v313
    %429 = vmatmul.mubr.f32.gmra.mrb[0].mxu0 %v246
    %v430 = vpop.f32.mrb[0].mxu0
    %v431 = vadd.f32 %v303, %v430
    %v432 = vpop.f32.mrb[0].mxu0
    %433 = vmatprep.mubr.f32.mxu0 %v316
    %434 = vmatmul.mubr.f32.gmra.mrb[0].mxu0 %v248
    %v435 = vpop.f32.mrb[0].mxu0
    %v436 = vadd.f32 %v303, %v435
    %v437 = vpop.f32.mrb[0].mxu0
    %438 = vmatprep.mubr.f32.mxu0 %v319
    %439 = vmatmul.mubr.f32.gmra.mrb[0].mxu0 %v250
    %v440 = vpop.f32.mrb[0].mxu0
    %v441 = vadd.f32 %v303, %v440
    %v442 = vpop.f32.mrb[0].mxu0
    %443 = vmatprep.mubr.f32.mxu0 %v322
    %444 = vmatmul.mubr.f32.gmra.mrb[0].mxu0 %v252
    %v445 = vpop.f32.mrb[0].mxu0
    %v446 = vadd.f32 %v303, %v445
    %v447 = vpop.f32.mrb[0].mxu0
    %448 = vmatprep.mubr.f32.mxu0 %v325
    %449 = vmatmul.mubr.f32.gmra.mrb[0].mxu0 %v254
    %v450 = vpop.f32.mrb[0].mxu0
    %v451 = vadd.f32 %v303, %v450
    %v452 = vpop.f32.mrb[0].mxu0
    %453 = vmatprep.mubr.f32.mxu0 %v328
    %454 = vmatmul.mubr.f32.gmra.mrb[0].mxu0 %v256
    %v455 = vpop.f32.mrb[0].mxu0
    %v456 = vadd.f32 %v303, %v455
    %v457 = vpop.f32.mrb[0].mxu0
    %458 = vmatprep.mubr.f32.mxu0 %v331
    %459 = vmatmul.mubr.f32.gmra.mrb[0].mxu0 %v258
    %v460 = vpop.f32.mrb[0].mxu0
    %v461 = vadd.f32 %v303, %v460
    %v462 = vpop.f32.mrb[0].mxu0
    %463 = vmatprep.mubr.f32.mxu0 %v334
    %464 = vmatmul.mubr.f32.gmra.mrb[0].mxu0 %v260
    %v465 = vpop.f32.mrb[0].mxu0
    %v466 = vadd.f32 %v303, %v465
    %v467 = vpop.f32.mrb[0].mxu0
    %468 = vmatprep.mubr.f32.mxu0 %v337
    %469 = vmatmul.mubr.f32.gmra.mrb[0].mxu0 %v262
    %v470 = vpop.f32.mrb[0].mxu0
    %v471 = vadd.f32 %v303, %v470
    %v472 = vpop.f32.mrb[0].mxu0
    %473 = vmatprep.mubr.f32.mxu0 %v340
    %474 = vmatmul.mubr.f32.gmra.mrb[0].mxu0 %v264
    %v475 = vpop.f32.mrb[0].mxu0
    %v476 = vadd.f32 %v303, %v475
    %v477 = vpop.f32.mrb[0].mxu0
    %478 = vmatprep.mubr.f32.mxu0 %v343
    %479 = vmatmul.mubr.f32.gmra.mrb[0].mxu0 %v266
    %v480 = vpop.f32.mrb[0].mxu0
    %v481 = vadd.f32 %v303, %v480
    %v482 = vpop.f32.mrb[0].mxu0
    %483 = vmatprep.mubr.f32.mxu0 %v346
    %484 = vmatmul.mubr.f32.gmra.mrb[0].mxu0 %v268
    %v485 = vpop.f32.mrb[0].mxu0
    %v486 = vadd.f32 %v303, %v485
    %v487 = vpop.f32.mrb[0].mxu0
    %488 = vmatprep.mubr.f32.mxu0 %v349
    %489 = vmatmul.mubr.f32.gmra.mrb[0].mxu0 %v270
    %v490 = vpop.f32.mrb[0].mxu0
    %v491 = vadd.f32 %v303, %v490
    %v492 = vpop.f32.mrb[0].mxu0
    %493 = vmatprep.mubr.f32.mxu0 %v352
    %494 = vmatmul.mubr.f32.gmra.mrb[0].mxu0 %v272
    %v495 = vpop.f32.mrb[0].mxu0
    %v496 = vadd.f32 %v303, %v495
    %v497 = vpop.f32.mrb[0].mxu0
    %498 = vdwg.mxu0
    %499 = vst [vmem:[#allocation2] sm:$0xff] %v421
    %500 = vst [vmem:[#allocation2 + $0x8] sm:$0xff] %v426
    %501 = vst [vmem:[#allocation2 + $0x10] sm:$0xff] %v431
    %502 = vst [vmem:[#allocation2 + $0x18] sm:$0xff] %v436
    %503 = vst [vmem:[#allocation2 + $0x20] sm:$0xff] %v441
    %504 = vst [vmem:[#allocation2 + $0x28] sm:$0xff] %v446
    %505 = vst [vmem:[#allocation2 + $0x30] sm:$0xff] %v451
    %506 = vst [vmem:[#allocation2 + $0x38] sm:$0xff] %v456
    %507 = vst [vmem:[#allocation2 + $0x40] sm:$0xff] %v461
    %508 = vst [vmem:[#allocation2 + $0x48] sm:$0xff] %v466
    %509 = vst [vmem:[#allocation2 + $0x50] sm:$0xff] %v471
    %510 = vst [vmem:[#allocation2 + $0x58] sm:$0xff] %v476
    %511 = vst [vmem:[#allocation2 + $0x60] sm:$0xff] %v481
    %512 = vst [vmem:[#allocation2 + $0x68] sm:$0xff] %v486
    %513 = vst [vmem:[#allocation2 + $0x70] sm:$0xff] %v491
    %514 = vst [vmem:[#allocation2 + $0x78] sm:$0xff] %v496
    // Predicated region
    $region22: #{tpu_custom_call.1} parent=1 // pred_check
      _
    $region23: #{tpu_custom_call.1} parent=1 // pred_check_branch
      %516 = sbr.rel (0) target = $region25
    $region24: #{tpu_custom_call.1} parent=1 // pred_region
      %s518 = ssub.s32 2048, 2048
      %519 = vsyncadd [#allocation3], %s518
      %s520 = sshll.u32 [#allocation2], 4
      %s521 = int_to_ptr.vmem [resolvable:$true] %s520
      %526 = dma.vmem_to_hbm [thread:$0]  %s521, 2048, %s5, [#allocation3], 128, 128, 8
    $region25: #{tpu_custom_call.1} parent=1 // pred_fallthru
      _
    // Predicated region
    $region26: #{tpu_custom_call.1} parent=1 // pred_check
      _
    $region27: #{tpu_custom_call.1} parent=1 // pred_check_branch
      %528 = sbr.rel (0) target = $region29
    $region28: #{tpu_custom_call.1} parent=1 // pred_region
      %529 = dma.done [#allocation3], 2048
    $region29: #{tpu_custom_call.1} parent=1 // pred_fallthru
      _
    %530 = vsyncpa [#allocation3], 1

</llo_original>
